<compile_context>
chip_gen: v7x
topology: tpu7x:2x2x1
jax: 0.10.0
libtpu: 0.0.40
codegen_flags: <defaults>
</compile_context>

<pallas_src>
import math

import jax
import jax.numpy as jnp
from jax.experimental import pallas as pl
from jax.experimental.pallas import tpu as pltpu


def _round_up(x, m):
    return ((x + m - 1) // m) * m


def _cdiv(a, b):
    return (a + b - 1) // b


# ----------------------------------------------------------------------------
# Pallas kernel: (td, C) @ (C, M) -> f32 accumulate, add f32 bias, cast store
# ----------------------------------------------------------------------------
def _proj_kernel(w_ref, p_ref, b_ref, o_ref):
    acc = jnp.dot(w_ref[...], p_ref[...], preferred_element_type=jnp.float32)
    o_ref[...] = (acc + b_ref[...]).astype(o_ref.dtype)


# ----------------------------------------------------------------------------
# Module-equivalent setup: constant fourier buffer + padded/cast projection
# constants (all init-time work — the pallas_call is the only runtime op)
# ----------------------------------------------------------------------------
def build_pos_buffer(token_grid_H, token_grid_W, hidden_dim, temperature=10000.0):
    """Replicates the __init__ buffer computation. Returns (H, W, 2*hidden_dim)
    (channels-last view of PyTorch's (2*hidden_dim, H, W) buffer)."""
    H, W = token_grid_H, token_grid_W
    scale = 2.0 * math.pi
    eps = 1e-6

    not_mask = jnp.ones((H, W), dtype=jnp.float32)
    y_embed = jnp.cumsum(not_mask, axis=0)
    x_embed = jnp.cumsum(not_mask, axis=1)
    y_embed = y_embed / (y_embed[-1:, :] + eps) * scale
    x_embed = x_embed / (x_embed[:, -1:] + eps) * scale

    dim_t = jnp.arange(hidden_dim, dtype=jnp.float32)
    dim_t = temperature ** (2.0 * jnp.floor(dim_t / 2.0) / hidden_dim)

    pos_x = x_embed[:, :, None] / dim_t  # (H, W, hidden_dim)
    pos_y = y_embed[:, :, None] / dim_t
    pos_x = jnp.stack(
        (jnp.sin(pos_x[:, :, 0::2]), jnp.cos(pos_x[:, :, 1::2])), axis=3
    ).reshape(H, W, -1)
    pos_y = jnp.stack(
        (jnp.sin(pos_y[:, :, 0::2]), jnp.cos(pos_y[:, :, 1::2])), axis=3
    ).reshape(H, W, -1)
    pos = jnp.concatenate((pos_y, pos_x), axis=2)  # (H, W, 2*hidden_dim)
    return pos


def prepare_token_projection(
    pos_hwc,
    conv_w,
    conv_b,
    *,
    flatten=True,
    compute_dtype=jnp.bfloat16,
    out_dtype=jnp.bfloat16,
):
    """
    pos_hwc : (H, W, 2*hidden_dim)      -- constant buffer (channels-last)
    conv_w  : (dim, 2*hidden_dim, 1, 1) -- Conv2d weight (PyTorch layout)
    conv_b  : (dim,)

    Does all constant work once (pixel permutation for the final layout, output
    channel padding, bf16 cast) and returns a params dict consumed by
    positional_encoding_fourier_forward().
    """
    H, W, C = pos_hwc.shape
    D = conv_w.shape[0]
    assert conv_w.shape[1] == C and conv_w.shape[2] == 1 and conv_w.shape[3] == 1

    # Pixel ordering chosen so the kernel output reshapes directly into the
    # module's return layout with no runtime transpose:
    #   flatten=True  -> (D, W, H): column order m = w*H + h
    #   flatten=False -> (D, H, W): column order m = h*W + w
    if flatten:
        p_cm = jnp.transpose(pos_hwc, (2, 1, 0)).reshape(C, W * H)
        out_dims = (W, H)
    else:
        p_cm = jnp.transpose(pos_hwc, (2, 0, 1)).reshape(C, H * W)
        out_dims = (H, W)
    M = p_cm.shape[1]

    wd = conv_w.reshape(D, C)

    # Output-channel tiling: single grid step unless D is large enough that
    # each tile still gets >= 512 rows (amortizes per-step overhead and lets
    # the two v7x TensorCores split big problems).  At XCiT sizes this is
    # grid=(1,) — the whole problem fits comfortably in VMEM.
    D8 = _round_up(D, 8)
    if D8 >= 1024:
        grid_d = max(2, D8 // 512)
        td = _round_up(_cdiv(D8, grid_d), 8)
    else:
        grid_d = 1
        td = D8
    Dp = td * grid_d

    if Dp != D:
        wd = jnp.pad(wd, ((0, Dp - D), (0, 0)))
        b = jnp.pad(conv_b, (0, Dp - D))
    else:
        b = conv_b

    # bf16 feeds halve HBM traffic; the MXU accumulates in f32, bias adds in f32.
    wd = wd.astype(compute_dtype)
    p_cm = p_cm.astype(compute_dtype)
    b_col = b.reshape(Dp, 1).astype(jnp.float32)

    return dict(
        w=wd, p=p_cm, b=b_col,
        D=D, Dp=Dp, M=M, td=td, grid_d=grid_d,
        out_dims=out_dims, out_dtype=out_dtype, flatten=flatten,
    )


def token_projection_pallas(params):
    """Runs the 1x1-conv matmul: returns (Dp, M) in params['out_dtype']."""
    w, p, b = params["w"], params["p"], params["b"]
    Dp, M, td, grid_d = params["Dp"], params["M"], params["td"], params["grid_d"]
    C = w.shape[1]
    out_dtype = params["out_dtype"]
    out_itemsize = jnp.dtype(out_dtype).itemsize

    cost = pl.CostEstimate(
        flops=int(2 * Dp * C * M),
        transcendentals=0,
        bytes_accessed=int(
            (Dp * C + C * M) * w.dtype.itemsize + Dp * 4 + Dp * M * out_itemsize
        ),
    )

    blk_bytes = (
        td * C * w.dtype.itemsize   # weight tile
        + C * M * p.dtype.itemsize  # constant P block
        + td * 4                    # bias tile
        + td * M * out_itemsize     # output tile
    )
    # Small, explicit VMEM budget — blocks are tiny; stay far below v7x's 64 MiB.
    vmem_limit = int(min(max(4 * blk_bytes, 8 << 20), 48 << 20))

    w_spec = pl.BlockSpec((td, C), lambda i: (i, 0))
    b_spec = pl.BlockSpec((td, 1), lambda i: (i, 0))
    o_spec = pl.BlockSpec((td, M), lambda i: (i, 0))
    if grid_d > 1:
        # P never changes across grid steps -> single buffer (VMEM headroom on v7x).
        p_spec = pl.BlockSpec((C, M), lambda i: (0, 0), pipeline_mode=pl.Buffered(1))
    else:
        p_spec = pl.BlockSpec((C, M), lambda i: (0, 0))

    out = pl.pallas_call(
        _proj_kernel,
        out_shape=jax.ShapeDtypeStruct((Dp, M), out_dtype),
        grid_spec=pltpu.PrefetchScalarGridSpec(
            num_scalar_prefetch=0,
            grid=(grid_d,),
            in_specs=[w_spec, p_spec, b_spec],
            out_specs=o_spec,
        ),
        compiler_params=pltpu.CompilerParams(
            dimension_semantics=("parallel",),  # D tiles shard across TCs on v7x
            vmem_limit_bytes=vmem_limit,
        ),
        cost_estimate=cost,
    )(w, p, b)
    return out


def positional_encoding_fourier_forward(params):
    """
    Returns exactly what the PyTorch module's forward() returns (modulo the
    intentional bf16 output dtype):
      flatten=True  -> (dim, W, H)   (flatten(2).transpose(1,2) on unbatched 3-D)
      flatten=False -> (dim, H, W)
    """
    y = token_projection_pallas(params)  # (Dp, M), already in final pixel order
    D = params["D"]
    if params["Dp"] != D:
        y = y[:D]
    d0, d1 = params["out_dims"]
    return y.reshape(D, d0, d1)  # metadata-only reshape, no transpose


if __name__ == "__main__":
    # Small, module-consistent shapes
    token_grid_H, token_grid_W = 8, 8
    hidden_dim = 16          # conv in-channels = 2 * hidden_dim = 32
    dim = 64                 # conv out-channels
    temperature = 10000.0
    flatten = True

    # Deterministic params (shapes match nn.Conv2d(2*hidden_dim, dim, 1))
    key = jax.random.PRNGKey(0)
    kw, kb = jax.random.split(key)
    fan_in = 2 * hidden_dim
    bound = 1.0 / math.sqrt(fan_in)
    conv_w = jax.random.uniform(
        kw, (dim, 2 * hidden_dim, 1, 1), minval=-bound, maxval=bound, dtype=jnp.float32
    )
    conv_b = jax.random.uniform(
        kb, (dim,), minval=-bound, maxval=bound, dtype=jnp.float32
    )

    pos_hwc = build_pos_buffer(token_grid_H, token_grid_W, hidden_dim, temperature)

    # Init-time constant prep (permute / pad / cast) — done once, off the hot path.
    params = prepare_token_projection(pos_hwc, conv_w, conv_b, flatten=flatten)

    out = positional_encoding_fourier_forward(params)
    out = jax.block_until_ready(out)
    assert out.shape == (dim, token_grid_W, token_grid_H), out.shape
    out_f32 = out.astype(jnp.float32)

    wt = conv_w.reshape(dim, 2 * hidden_dim)

    # Reference with the same precision contract as the kernel (bf16 inputs,
    # f32 accumulation); the only extra error is the bf16 output quantization.
    ref_bf = jnp.einsum(
        "dc,hwc->dwh",
        wt.astype(jnp.bfloat16),
        pos_hwc.astype(jnp.bfloat16),
        preferred_element_type=jnp.float32,
    ) + conv_b[:, None, None]
    assert jnp.allclose(out_f32, ref_bf, atol=2e-2, rtol=2e-2), float(
        jnp.max(jnp.abs(out_f32 - ref_bf))
    )

    # Loose check against full-f32 math (PyTorch module values); tolerance
    # covers the intentional bf16 input/output quantization.
    ref32 = jnp.einsum("dc,hwc->dwh", wt, pos_hwc) + conv_b[:, None, None]
    assert jnp.allclose(out_f32, ref32, atol=6e-2), float(
        jnp.max(jnp.abs(out_f32 - ref32))
    )

    print("KERNEL_OK")
</pallas_src>

<mosaic_0001>
module attributes {stable_mosaic.version = 11 : i64} {
  func.func @_proj_kernel(%arg0: i32, %arg1: memref<64x32xbf16, #tpu.memory_space<vmem>>, %arg2: memref<32x64xbf16, #tpu.memory_space<vmem>>, %arg3: memref<64x1xf32, #tpu.memory_space<vmem>>, %arg4: memref<64x64xbf16, #tpu.memory_space<vmem>>) attributes {dimension_semantics = [#tpu.dimension_semantics<parallel>], iteration_bounds = array<i64: 1>, scalar_prefetch = 0 : i64, scratch_operands = 0 : i64, tpu.core_type = #tpu.core_type<tc>, window_params = [{transform_indices = @transform_0, window_bounds = array<i64: 64, 32>}, {pipeline_mode = #tpu.pipeline_mode<synchronous>, transform_indices = @transform_1, window_bounds = array<i64: 32, 64>}, {transform_indices = @transform_2, window_bounds = array<i64: 64, 1>}, {transform_indices = @transform_3, window_bounds = array<i64: 64, 64>}]} {
    %c0 = arith.constant 0 : index
    %c0_0 = arith.constant 0 : index
    %0 = vector.load %arg1[%c0, %c0_0] : memref<64x32xbf16, #tpu.memory_space<vmem>>, vector<64x32xbf16>
    %c0_1 = arith.constant 0 : index
    %c0_2 = arith.constant 0 : index
    %1 = vector.load %arg2[%c0_1, %c0_2] : memref<32x64xbf16, #tpu.memory_space<vmem>>, vector<32x64xbf16>
    %cst = arith.constant dense<0.000000e+00> : vector<64x64xf32>
    %2 = tpu.matmul %0, %1, %cst {dimension_numbers = #tpu.dot_dimension_numbers<[1], [0], [0], [1], [0, 0, 1, 1], [], []>} : vector<64x32xbf16>, vector<32x64xbf16>, vector<64x64xf32> -> vector<64x64xf32>
    %c0_3 = arith.constant 0 : index
    %c0_4 = arith.constant 0 : index
    %3 = vector.load %arg3[%c0_3, %c0_4] : memref<64x1xf32, #tpu.memory_space<vmem>>, vector<64x1xf32>
    %4 = vector.broadcast %3 : vector<64x1xf32> to vector<64x64xf32>
    %5 = arith.addf %2, %4 : vector<64x64xf32>
    %6 = arith.truncf %5 : vector<64x64xf32> to vector<64x64xbf16>
    %c0_5 = arith.constant 0 : index
    %c0_6 = arith.constant 0 : index
    %7 = vector.load %arg4[%c0_5, %c0_6] : memref<64x64xbf16, #tpu.memory_space<vmem>>, vector<64x64xbf16>
    tpu.vector_store %arg4[%c0_5, %c0_6], %6 {strides = array<i32>} : memref<64x64xbf16, #tpu.memory_space<vmem>>, vector<64x64xbf16>,
    return
  }
  func.func @transform_0(%arg0: i32) -> (i32, i32) {
    %c0_i32 = arith.constant 0 : i32
    %c0_i32_0 = arith.constant 0 : i32
    return %arg0, %c0_i32 : i32, i32
  }
  func.func @transform_1(%arg0: i32) -> (i32, i32) {
    %c0_i32 = arith.constant 0 : i32
    %c0_i32_0 = arith.constant 0 : i32
    %c0_i32_1 = arith.constant 0 : i32
    return %c0_i32, %c0_i32_0 : i32, i32
  }
  func.func @transform_2(%arg0: i32) -> (i32, i32) {
    %c0_i32 = arith.constant 0 : i32
    %c0_i32_0 = arith.constant 0 : i32
    return %arg0, %c0_i32 : i32, i32
  }
  func.func @transform_3(%arg0: i32) -> (i32, i32) {
    %c0_i32 = arith.constant 0 : i32
    %c0_i32_0 = arith.constant 0 : i32
    return %arg0, %c0_i32 : i32, i32
  }
}

</mosaic_0001>

<llo_original>
// kernel: tpu_custom_call.1
$region0: #{tpu_custom_call.1}
  #allocation0 [shape = 'u32[]', space=smem, size = 0x4, offset = 0x4, fixed_abs, tag = 'smem constant byte address 0x4 - core index']
  #allocation1 [shape = 'u32[144,128]{1,0:T(1,128)}', space=vmem, size = 0x12000, scoped, tag = 'internal scratch']
  %s0 = inlined_call_operand.vmem [shape: bf16[64,32], index: 0, kind: input, shape index: {}]
  %s1 = inlined_call_operand.vmem [shape: bf16[32,64], index: 1, kind: input, shape index: {}]
  %s2 = inlined_call_operand.vmem [shape: f32[64,1], index: 2, kind: input, shape index: {}]
  %s3 = inlined_call_operand.hbm [shape: bf16[64,64], index: 3, kind: output, shape index: {}]
  %s4 = sld [smem:[#allocation0]]
  $region22: #{tpu_custom_call.1} parent=0
    _
  %s6 = ssub.s32 1, %s4
  %s7 = scalar_select 0, %s6, %s4
  $region1: #{tpu_custom_call.1} parent=0
    #allocation2 [shape = 'u8[16384]{0}', space=vmem, size = 0x4000, scoped, tag = 'output window, operand 0, single buffered']
    #allocation3 [shape = 's32[1]{0}', space=sflag, size = 0x4, scoped, tag = 'scoped memory for tpu_custom_call.1']
    %8 = vsyncpa [#allocation3], 0
    // Predicated region
    $region2: #{tpu_custom_call.1} parent=1 // pred_check
      _
    $region3: #{tpu_custom_call.1} parent=1 // pred_check_branch
      %10 = sbr.rel (0) target = $region5
    $region4: #{tpu_custom_call.1} parent=1 // pred_region
      _
    $region5: #{tpu_custom_call.1} parent=1 // pred_fallthru
      _
    // Predicated region
    $region6: #{tpu_custom_call.1} parent=1 // pred_check
      _
    $region7: #{tpu_custom_call.1} parent=1 // pred_check_branch
      %12 = sbr.rel (0) target = $region9
    $region8: #{tpu_custom_call.1} parent=1 // pred_region
      _
    $region9: #{tpu_custom_call.1} parent=1 // pred_fallthru
      _
    // Predicated region
    $region10: #{tpu_custom_call.1} parent=1 // pred_check
      _
    $region11: #{tpu_custom_call.1} parent=1 // pred_check_branch
      %14 = sbr.rel (0) target = $region13
    $region12: #{tpu_custom_call.1} parent=1 // pred_region
      _
    $region13: #{tpu_custom_call.1} parent=1 // pred_fallthru
      _
    %v16 = vld [vmem:[%s0] sm:$0xf]
    %v17 = vld [vmem:[%s0 + $0x4] sm:$0xf]
    %v18 = vld [vmem:[%s0 + $0x8] sm:$0xf]
    %v19 = vld [vmem:[%s0 + $0xc] sm:$0xf]
    %v20 = vld [vmem:[%s0 + $0x10] sm:$0xf]
    %v21 = vld [vmem:[%s0 + $0x14] sm:$0xf]
    %v22 = vld [vmem:[%s0 + $0x18] sm:$0xf]
    %v23 = vld [vmem:[%s0 + $0x1c] sm:$0xf]
    %v24 = vld [vmem:[%s1] sm:$0xf]
    %v25 = vld [vmem:[%s1 + $0x4] sm:$0xf]
    %v26 = vld [vmem:[%s1 + $0x8] sm:$0xf]
    %v27 = vld [vmem:[%s1 + $0xc] sm:$0xf]
    %v28 = vld [vmem:[%s2] sm:$0xff]
    %v29 = vld [vmem:[%s2 + $0x8] sm:$0xff]
    %v30 = vld [vmem:[%s2 + $0x10] sm:$0xff]
    %v31 = vld [vmem:[%s2 + $0x18] sm:$0xff]
    %v32 = vld [vmem:[%s2 + $0x20] sm:$0xff]
    %v33 = vld [vmem:[%s2 + $0x28] sm:$0xff]
    %v34 = vld [vmem:[%s2 + $0x30] sm:$0xff]
    %v35 = vld [vmem:[%s2 + $0x38] sm:$0xff]
    %37 = vset.pattern.permute.xlu0 0
    %38 = vperm.xlu0 %37, %v28
    %v39 = vpop.permute.xlu0 %38
    %42 = vset.pattern.permute.xlu0 0
    %43 = vperm.xlu0 %42, %v29
    %v44 = vpop.permute.xlu0 %43
    %47 = vset.pattern.permute.xlu0 0
    %48 = vperm.xlu0 %47, %v30
    %v49 = vpop.permute.xlu0 %48
    %52 = vset.pattern.permute.xlu0 0
    %53 = vperm.xlu0 %52, %v31
    %v54 = vpop.permute.xlu0 %53
    %57 = vset.pattern.permute.xlu0 0
    %58 = vperm.xlu0 %57, %v32
    %v59 = vpop.permute.xlu0 %58
    %62 = vset.pattern.permute.xlu0 0
    %63 = vperm.xlu0 %62, %v33
    %v64 = vpop.permute.xlu0 %63
    %67 = vset.pattern.permute.xlu0 0
    %68 = vperm.xlu0 %67, %v34
    %v69 = vpop.permute.xlu0 %68
    %72 = vset.pattern.permute.xlu0 0
    %73 = vperm.xlu0 %72, %v35
    %v74 = vpop.permute.xlu0 %73
    %v84 = vunpack.c.l.b16 %v16
    %v85 = vunpack.c.l.b16 %v17
    %v86 = vunpack.c.l.b16 %v18
    %v87 = vunpack.c.l.b16 %v19
    %v88 = vunpack.c.l.b16 %v20
    %v89 = vunpack.c.l.b16 %v21
    %v90 = vunpack.c.l.b16 %v22
    %v91 = vunpack.c.l.b16 %v23
    %v92 = vpack.c.b16 %v85, %v84
    %v93 = vpack.c.b16 %v87, %v86
    %v94 = vpack.c.b16 %v89, %v88
    %v95 = vpack.c.b16 %v91, %v90
    %v100 = vunpack.c.l.b16 %v24
    %v101 = vunpack.c.l.b16 %v25
    %v102 = vunpack.c.l.b16 %v26
    %v103 = vunpack.c.l.b16 %v27
    %v104 = vpack.c.b16 %v101, %v100
    %v105 = vpack.c.b16 %v103, %v102
    %vm108 = vcmask 261120
    %v110 = vsel %vm108, %v92, 0
    %v113 = vsel %vm108, %v93, 0
    %v116 = vsel %vm108, %v94, 0
    %v119 = vsel %vm108, %v95, 0
    %121 = vmatprep.subr.bf16.mxu0 0
    %122 = vmatpush1.bf16.msra.mxu0 %v104
    %123 = vmatprep.subr.bf16.mxu0 0
    %124 = vmatpush1.bf16.msra.mxu0 %v105
    %125 = vmatprep.subr.bf16.mxu0 0
    %126 = vmatpush1.bf16.msra.mxu0 0
    %127 = vmatprep.subr.bf16.mxu0 0
    %128 = vmatpush1.bf16.msra.mxu0 0
    %129 = vmatprep.subr.bf16.mxu0 0
    %130 = vmatpush1.bf16.msra.mxu0 0
    %131 = vmatprep.subr.bf16.mxu0 0
    %132 = vmatpush1.bf16.msra.mxu0 0
    %133 = vmatprep.subr.bf16.mxu0 0
    %134 = vmatpush1.bf16.msra.mxu0 0
    %135 = vmatprep.subr.bf16.mxu0 0
    %136 = vmatpush1.bf16.msra.mxu0 0
    %137 = vmatprep.subr.bf16.mxu0 0
    %138 = vmatpush1.bf16.msra.mxu0 0
    %139 = vmatprep.subr.bf16.mxu0 0
    %140 = vmatpush1.bf16.msra.mxu0 0
    %141 = vmatprep.subr.bf16.mxu0 0
    %142 = vmatpush1.bf16.msra.mxu0 0
    %143 = vmatprep.subr.bf16.mxu0 0
    %144 = vmatpush1.bf16.msra.mxu0 0
    %145 = vmatprep.subr.bf16.mxu0 0
    %146 = vmatpush1.bf16.msra.mxu0 0
    %147 = vmatprep.subr.bf16.mxu0 0
    %148 = vmatpush1.bf16.msra.mxu0 0
    %149 = vmatprep.subr.bf16.mxu0 0
    %150 = vmatpush1.bf16.msra.mxu0 0
    %151 = vmatprep.subr.bf16.mxu0 0
    %152 = vmatpush1.bf16.msra.mxu0 0
    %153 = vmatprep.mubr.bf16.mxu0 0
    %154 = vmatmul.mubr.bf16.gmra.mrb[0].mxu0 %v110
    %v155 = vpop.f32.mrb[0].mxu0
    %v156 = vadd.f32 %v39, %v155
    %v157 = vpop.f32.mrb[0].mxu0
    %v158 = vpop.f32.mrb[0].mxu0
    %v159 = vadd.f32 %v44, %v158
    %v160 = vpop.f32.mrb[0].mxu0
    %161 = vmatprep.mubr.bf16.mxu0 0
    %162 = vmatmul.mubr.bf16.gmra.mrb[0].mxu0 %v113
    %v163 = vpop.f32.mrb[0].mxu0
    %v164 = vadd.f32 %v49, %v163
    %v165 = vpop.f32.mrb[0].mxu0
    %v166 = vpop.f32.mrb[0].mxu0
    %v167 = vadd.f32 %v54, %v166
    %v168 = vpop.f32.mrb[0].mxu0
    %169 = vmatprep.mubr.bf16.mxu0 0
    %170 = vmatmul.mubr.bf16.gmra.mrb[0].mxu0 %v116
    %v171 = vpop.f32.mrb[0].mxu0
    %v172 = vadd.f32 %v59, %v171
    %v173 = vpop.f32.mrb[0].mxu0
    %v174 = vpop.f32.mrb[0].mxu0
    %v175 = vadd.f32 %v64, %v174
    %v176 = vpop.f32.mrb[0].mxu0
    %177 = vmatprep.mubr.bf16.mxu0 0
    %178 = vmatmul.mubr.bf16.gmra.mrb[0].mxu0 %v119
    %v179 = vpop.f32.mrb[0].mxu0
    %v180 = vadd.f32 %v69, %v179
    %v181 = vpop.f32.mrb[0].mxu0
    %v182 = vpop.f32.mrb[0].mxu0
    %v183 = vadd.f32 %v74, %v182
    %v184 = vpop.f32.mrb[0].mxu0
    %185 = vdwg.mxu0
    %v186 = vpack.c.bf16 %v159, %v156
    %v187 = vpack.c.bf16 %v167, %v164
    %v188 = vpack.c.bf16 %v175, %v172
    %v189 = vpack.c.bf16 %v183, %v180
    %v194 = vunpack.c.l.b16 %v186
    %v195 = vunpack.c.h.b16 %v186
    %v196 = vunpack.c.l.b16 %v187
    %v197 = vunpack.c.h.b16 %v187
    %v198 = vunpack.c.l.b16 %v188
    %v199 = vunpack.c.h.b16 %v188
    %v200 = vunpack.c.l.b16 %v189
    %v201 = vunpack.c.h.b16 %v189
    %v202 = vpack.c.b16 %v194, %v194
    %v203 = vpack.c.b16 %v195, %v195
    %v204 = vpack.c.b16 %v196, %v196
    %v205 = vpack.c.b16 %v197, %v197
    %v206 = vpack.c.b16 %v198, %v198
    %v207 = vpack.c.b16 %v199, %v199
    %v208 = vpack.c.b16 %v200, %v200
    %v209 = vpack.c.b16 %v201, %v201
    %vm218 = vcmask 519168
    %219 = vst.msk [vmem:[#allocation2] sm:$0xf] %vm218, %v202
    %220 = vst.msk [vmem:[#allocation2 + $0x4] sm:$0xf] %vm218, %v203
    %221 = vst.msk [vmem:[#allocation2 + $0x8] sm:$0xf] %vm218, %v204
    %222 = vst.msk [vmem:[#allocation2 + $0xc] sm:$0xf] %vm218, %v205
    %223 = vst.msk [vmem:[#allocation2 + $0x10] sm:$0xf] %vm218, %v206
    %224 = vst.msk [vmem:[#allocation2 + $0x14] sm:$0xf] %vm218, %v207
    %225 = vst.msk [vmem:[#allocation2 + $0x18] sm:$0xf] %vm218, %v208
    %226 = vst.msk [vmem:[#allocation2 + $0x1c] sm:$0xf] %vm218, %v209
    // Predicated region
    $region14: #{tpu_custom_call.1} parent=1 // pred_check
      _
    $region15: #{tpu_custom_call.1} parent=1 // pred_check_branch
      %228 = sbr.rel (0) target = $region17
    $region16: #{tpu_custom_call.1} parent=1 // pred_region
      %s230 = ssub.s32 512, 512
      %231 = vsyncadd [#allocation3], %s230
      %s232 = sshll.u32 [#allocation2], 4
      %s233 = int_to_ptr.vmem [resolvable:$true] %s232
      %238 = dma.vmem_to_hbm [thread:$0]  %s233, 512, %s3, [#allocation3], 64, 64, 4
    $region17: #{tpu_custom_call.1} parent=1 // pred_fallthru
      _
    // Predicated region
    $region18: #{tpu_custom_call.1} parent=1 // pred_check
      _
    $region19: #{tpu_custom_call.1} parent=1 // pred_check_branch
      %240 = sbr.rel (0) target = $region21
    $region20: #{tpu_custom_call.1} parent=1 // pred_region
      %241 = dma.done [#allocation3], 512
    $region21: #{tpu_custom_call.1} parent=1 // pred_fallthru
      _
    %242 = vsyncpa [#allocation3], 1

</llo_original>
